<compile_context>
chip_gen: v5e
topology: v5e:2x2
jax: 0.10.0
libtpu: 0.0.40
codegen_flags: <defaults>
</compile_context>

<pallas_src>
import jax
import jax.numpy as jnp
from jax.experimental import pallas as pl
from jax.experimental.pallas import tpu as pltpu

_LANES = 128
_SMALL_N = 16 * 1024            # single-block fast-path threshold (elements)


def _make_cutoff_kernel(cutoff_radius: float, healing_length: float):
    rc = float(cutoff_radius)
    hl = float(healing_length)
    onset = rc - hl

    def cutoff_kernel(d_ref, o_ref):
        d = d_ref[...]
        # Exact transcription of the PyTorch forward (divide + two wheres):
        # keeps NaN behaviour (-> 1.0) and avoids reciprocal-vs-divide ulps.
        r = (d - onset) / hl
        r_fn = 1.0 + r * r * (2.0 * r - 3.0)
        switch = jnp.where(d > onset, r_fn, jnp.ones_like(d))
        o_ref[...] = jnp.where(d > rc, jnp.zeros_like(d), switch)

    return cutoff_kernel


def _round_up(x: int, m: int) -> int:
    return ((x + m - 1) // m) * m


def _device_kind() -> str:
    try:
        dev = jax.devices()[0]
        return dev.device_kind.lower() if dev.platform == "tpu" else ""
    except Exception:
        return ""


def _tuning():
    """(target_block_bytes, min_grid_steps) for the streaming path."""
    kind = _device_kind()
    # Single-TensorCore parts: no megacore, so never force extra grid steps.
    single_tc = any(t in kind for t in ("v5e", "v5 lite", "v5lite",
                                        "v6e", "v6 lite", "v6lite",
                                        "v2", "v3"))
    # 4 MiB blocks only on chips whose 32 MiB scoped-VMEM default comfortably
    # holds the 16 MiB double-buffered (in+out) footprint; 2 MiB blocks
    # (8 MiB footprint) elsewhere, incl. v5e's 16 MiB scoped default.
    big_vmem = any(t in kind for t in ("v6e", "v6 lite", "v6lite",
                                       "v7", "7x", "tpu7"))
    target_bytes = (4 << 20) if big_vmem else (2 << 20)
    # Dual-TC (v7x / megacore) parts: >= 2 blocks per TensorCore so each core
    # has read/compute/write overlap.  Unknown chips assume dual-TC (safe).
    min_steps = 1 if single_tc else 4
    return target_bytes, min_steps


def custom_cutoff(distances: jnp.ndarray,
                  cutoff_radius: float,
                  healing_length: float) -> jnp.ndarray:
    """Apply the CustomCutoff switching function elementwise on TPU."""
    orig_shape = distances.shape
    dtype = distances.dtype
    n = distances.size
    if n == 0:
        return jnp.zeros(orig_shape, dtype)

    kernel = _make_cutoff_kernel(cutoff_radius, healing_length)
    itemsize = jnp.dtype(dtype).itemsize
    sub_mult = 8 * max(1, 4 // max(1, itemsize))   # (8,128) f32, (16,128) bf16, ...
    lane_mult = sub_mult * _LANES                  # 1-D block granule (8*128*packing)

    # ---- small inputs: one block, sublane-dense view, no grid ---------------
    if n <= _SMALL_N:
        if n % _LANES == 0:
            view = (n // _LANES, _LANES)
        elif n % 8 == 0:
            view = (8, n // 8)
        else:
            view = (1, n)
        out = pl.pallas_call(
            kernel,
            out_shape=jax.ShapeDtypeStruct(view, dtype),
        )(distances.reshape(view))
        return out.reshape(orig_shape)

    target_bytes, min_steps = _tuning()
    flat = distances.reshape(-1)          # contiguous -> free bitcast reshape

    if n % _LANES == 0:
        # ---- lane-aligned streaming path: dense (rows, 128) view ------------
        rows = n // _LANES
        target_rows = max(sub_mult,
                          (target_bytes // (_LANES * itemsize)) // sub_mult * sub_mult)
        block_rows = min(target_rows,
                         _round_up(pl.cdiv(rows, min_steps), sub_mult))
        x2d = flat.reshape(rows, _LANES)
        out2d = pl.pallas_call(
            kernel,
            out_shape=jax.ShapeDtypeStruct((rows, _LANES), dtype),
            grid=(pl.cdiv(rows, block_rows),),   # last block masked by Pallas
            in_specs=[pl.BlockSpec((block_rows, _LANES), lambda i: (i, 0))],
            out_specs=pl.BlockSpec((block_rows, _LANES), lambda i: (i, 0)),
            compiler_params=pltpu.CompilerParams(
                dimension_semantics=("parallel",)),
        )(x2d)
        return out2d.reshape(orig_shape)

    # ---- ragged streaming path (n % 128 != 0): 1-D blocks, no pad/slice -----
    # Block size is a multiple of 8*128*packing elements; Pallas masks the
    # ragged last block, so there is no jnp.pad before the call and no
    # out[:n] slice after it (each would cost a full extra HBM read+write).
    target_elems = max(lane_mult,
                       (target_bytes // itemsize) // lane_mult * lane_mult)
    block_elems = min(target_elems,
                      _round_up(pl.cdiv(n, min_steps), lane_mult))
    out = pl.pallas_call(
        kernel,
        out_shape=jax.ShapeDtypeStruct((n,), dtype),
        grid=(pl.cdiv(n, block_elems),),
        in_specs=[pl.BlockSpec((block_elems,), lambda i: (i,))],
        out_specs=pl.BlockSpec((block_elems,), lambda i: (i,)),
        compiler_params=pltpu.CompilerParams(
            dimension_semantics=("parallel",)),
    )(flat)
    return out.reshape(orig_shape)


def custom_cutoff_ref(distances, cutoff_radius, healing_length):
    """Pure-JAX reference mirroring the PyTorch forward exactly."""
    rc = jnp.asarray(cutoff_radius, distances.dtype)
    hl = jnp.asarray(healing_length, distances.dtype)
    r = (distances - (rc - hl)) / hl
    r_function = 1.0 + r ** 2 * (2.0 * r - 3.0)
    switch = jnp.where(distances > rc - hl, r_function,
                       jnp.ones_like(distances))
    return jnp.where(distances > rc, jnp.zeros_like(distances), switch)


if __name__ == "__main__":
    # Module "buffers" initialized deterministically in-script.
    cutoff_radius = 5.0
    healing_length = 1.0

    key = jax.random.PRNGKey(0)
    k1, k2, k3 = jax.random.split(key, 3)

    # (n_molecules=2, n_atoms=8, n_neighbors=16) -> single-block fast path.
    d_small = jax.random.uniform(k1, (2, 8, 16), jnp.float32, 0.0, 7.0)
    out_small = jax.block_until_ready(
        custom_cutoff(d_small, cutoff_radius, healing_length))
    ref_small = custom_cutoff_ref(d_small, cutoff_radius, healing_length)
    assert out_small.shape == d_small.shape and out_small.dtype == d_small.dtype
    assert jnp.allclose(out_small, ref_small, atol=1e-6, rtol=1e-5)

    # Lane-aligned streaming path (n = 65792, divisible by 128, > 16K).
    d_aligned = jax.random.uniform(k2, (4, 64, 257), jnp.float32, 0.0, 7.0)
    out_aligned = jax.block_until_ready(
        custom_cutoff(d_aligned, cutoff_radius, 1.5))
    ref_aligned = custom_cutoff_ref(d_aligned, cutoff_radius, 1.5)
    assert out_aligned.shape == d_aligned.shape
    assert jnp.allclose(out_aligned, ref_aligned, atol=1e-6, rtol=1e-5)

    # Ragged streaming path (n = 18574, not divisible by 128): 1-D blocks,
    # no pad before / slice after the pallas_call.
    d_ragged = jax.random.uniform(k3, (2, 37, 251), jnp.float32, 0.0, 7.0)
    out_ragged = jax.block_until_ready(
        custom_cutoff(d_ragged, cutoff_radius, 1.25))
    ref_ragged = custom_cutoff_ref(d_ragged, cutoff_radius, 1.25)
    assert out_ragged.shape == d_ragged.shape
    assert jnp.allclose(out_ragged, ref_ragged, atol=1e-6, rtol=1e-5)

    print("KERNEL_OK")
</pallas_src>

<mosaic_0001>
module attributes {stable_mosaic.version = 11 : i64} {
  func.func @cutoff_kernel(%arg0: memref<2x128xf32, #tpu.memory_space<vmem>>, %arg1: memref<2x128xf32, #tpu.memory_space<vmem>>) attributes {dimension_semantics = [], scalar_prefetch = 0 : i64, scratch_operands = 0 : i64, tpu.core_type = #tpu.core_type<tc>} {
    %c0 = arith.constant 0 : index
    %c0_0 = arith.constant 0 : index
    %0 = vector.load %arg0[%c0, %c0_0] : memref<2x128xf32, #tpu.memory_space<vmem>>, vector<2x128xf32>
    %cst = arith.constant 4.000000e+00 : f32
    %1 = vector.broadcast %cst : f32 to vector<2x128xf32>
    %2 = arith.subf %0, %1 : vector<2x128xf32>
    %cst_1 = arith.constant 1.000000e+00 : f32
    %3 = vector.broadcast %cst_1 : f32 to vector<2x128xf32>
    %4 = arith.divf %2, %3 : vector<2x128xf32>
    %5 = arith.mulf %4, %4 : vector<2x128xf32>
    %cst_2 = arith.constant 2.000000e+00 : f32
    %6 = vector.broadcast %cst_2 : f32 to vector<2x128xf32>
    %7 = arith.mulf %6, %4 : vector<2x128xf32>
    %cst_3 = arith.constant 3.000000e+00 : f32
    %8 = vector.broadcast %cst_3 : f32 to vector<2x128xf32>
    %9 = arith.subf %7, %8 : vector<2x128xf32>
    %10 = arith.mulf %5, %9 : vector<2x128xf32>
    %cst_4 = arith.constant 1.000000e+00 : f32
    %11 = vector.broadcast %cst_4 : f32 to vector<2x128xf32>
    %12 = arith.addf %11, %10 : vector<2x128xf32>
    %cst_5 = arith.constant 4.000000e+00 : f32
    %13 = vector.broadcast %cst_5 : f32 to vector<2x128xf32>
    %14 = arith.cmpf ogt, %0, %13 : vector<2x128xf32>
    %cst_6 = arith.constant 1.000000e+00 : f32
    %15 = vector.broadcast %cst_6 : f32 to vector<2x128xf32>
    %16 = arith.select %14, %12, %15 : vector<2x128xi1>, vector<2x128xf32>
    %cst_7 = arith.constant 5.000000e+00 : f32
    %17 = vector.broadcast %cst_7 : f32 to vector<2x128xf32>
    %18 = arith.cmpf ogt, %0, %17 : vector<2x128xf32>
    %cst_8 = arith.constant 0.000000e+00 : f32
    %19 = vector.broadcast %cst_8 : f32 to vector<2x128xf32>
    %20 = arith.select %18, %19, %16 : vector<2x128xi1>, vector<2x128xf32>
    %c0_9 = arith.constant 0 : index
    %c0_10 = arith.constant 0 : index
    %21 = vector.load %arg1[%c0_9, %c0_10] : memref<2x128xf32, #tpu.memory_space<vmem>>, vector<2x128xf32>
    tpu.vector_store %arg1[%c0_9, %c0_10], %20 {strides = array<i32>} : memref<2x128xf32, #tpu.memory_space<vmem>>, vector<2x128xf32>,
    return
  }
}

</mosaic_0001>

<llo_original>
// kernel: tpu_custom_call.1
$region0: #{tpu_custom_call.1}
  #allocation0 [shape = 'u32[]', space=smem, size = 0x4, offset = 0x4, fixed_abs, tag = 'smem constant byte address 0x4 - core index']
  #allocation1 [shape = 'u32[72,128]{1,0:T(1,128)}', space=vmem, size = 0x9000, scoped, tag = 'internal scratch']
  %s0 = inlined_call_operand.hbm [shape: f32[2,128], index: 0, kind: input, shape index: {}]
  %s1 = inlined_call_operand.hbm [shape: f32[2,128], index: 1, kind: output, shape index: {}]
  %s2 = sld [smem:[#allocation0]]
  $region18: #{tpu_custom_call.1} parent=0
    _
  %s4 = ssub.s32 1, %s2
  %s5 = scalar_select 0, %s4, %s2
  $region1: #{tpu_custom_call.1} parent=0
    #allocation2 [shape = 'u8[1024]{0}', space=vmem, size = 0x400, scoped, tag = 'input window, operand 0, single buffered']
    #allocation3 [shape = 's32[1]{0}', space=sflag, size = 0x4, scoped, tag = 'scoped memory for tpu_custom_call.1']
    #allocation4 [shape = 's32[1]{0}', space=sflag, size = 0x4, scoped, tag = 'scoped memory for tpu_custom_call.1']
    #allocation5 [shape = 'u8[1024]{0}', space=vmem, size = 0x400, scoped, tag = 'output window, operand 0, single buffered']
    %6 = vsyncpa [#allocation3], 0
    %7 = vsyncpa [#allocation4], 0
    // Predicated region
    $region2: #{tpu_custom_call.1} parent=1 // pred_check
      _
    $region3: #{tpu_custom_call.1} parent=1 // pred_check_branch
      %9 = sbr.rel (0) target = $region5
    $region4: #{tpu_custom_call.1} parent=1 // pred_region
      %11 = vsyncadd [#allocation3], 0
      %s13 = sshll.u32 %s0, 4
      %s14 = int_to_ptr.hbm [resolvable:$true] %s13
      %s15 = sshll.u32 [#allocation2], 4
      %s16 = int_to_ptr.vmem [resolvable:$true] %s15
      %18 = dma.hbm_to_vmem [thread:$0]  %s14, 32, %s16, [#allocation3]
    $region5: #{tpu_custom_call.1} parent=1 // pred_fallthru
      _
    // Predicated region
    $region6: #{tpu_custom_call.1} parent=1 // pred_check
      _
    $region7: #{tpu_custom_call.1} parent=1 // pred_check_branch
      %20 = sbr.rel (0) target = $region9
    $region8: #{tpu_custom_call.1} parent=1 // pred_region
      %22 = dma.done [#allocation3], 32
    $region9: #{tpu_custom_call.1} parent=1 // pred_fallthru
      _
    %v23 = vld [vmem:[#allocation2] sm:$0x3]
    %v24 = vsub.f32 %v23, 4.0
    %v25 = vmul.f32 %v24, %v24
    %v26 = vmul.f32 %v24, 2.0
    %v27 = vsub.f32 %v26, 3.0
    %v28 = vmul.f32 %v25, %v27
    %v29 = vadd.f32 %v28, 1.0
    %vm30 = vcmp.gt.f32.partialorder %v23, 4.0
    %v31 = vsel %vm30, %v29, 1.0
    %vm32 = vcmp.gt.f32.partialorder %v23, 5.0
    %v33 = vsel %vm32, 0.0, %v31
    %34 = vst [vmem:[#allocation5] sm:$0x3] %v33
    // Predicated region
    $region10: #{tpu_custom_call.1} parent=1 // pred_check
      _
    $region11: #{tpu_custom_call.1} parent=1 // pred_check_branch
      %36 = sbr.rel (0) target = $region13
    $region12: #{tpu_custom_call.1} parent=1 // pred_region
      %38 = vsyncadd [#allocation4], 0
      %s40 = sshll.u32 [#allocation5], 4
      %s41 = int_to_ptr.vmem [resolvable:$true] %s40
      %s42 = sshll.u32 %s1, 4
      %s43 = int_to_ptr.hbm [resolvable:$true] %s42
      %45 = dma.vmem_to_hbm [thread:$0]  %s41, 32, %s43, [#allocation4]
    $region13: #{tpu_custom_call.1} parent=1 // pred_fallthru
      _
    // Predicated region
    $region14: #{tpu_custom_call.1} parent=1 // pred_check
      _
    $region15: #{tpu_custom_call.1} parent=1 // pred_check_branch
      %47 = sbr.rel (0) target = $region17
    $region16: #{tpu_custom_call.1} parent=1 // pred_region
      %49 = dma.done [#allocation4], 32
    $region17: #{tpu_custom_call.1} parent=1 // pred_fallthru
      _
    %50 = vsyncpa [#allocation3], 1
    %51 = vsyncpa [#allocation4], 1

</llo_original>
